<compile_context>
chip_gen: v7x
topology: tpu7x:2x2x1
jax: 0.10.0
libtpu: 0.0.40
codegen_flags: <defaults>
</compile_context>

<pallas_src>
import math

import jax
import jax.numpy as jnp
from jax import lax
from jax.experimental import pallas as pl
from jax.experimental.pallas import tpu as pltpu

_LN_EPS = 1e-5                       # PyTorch nn.LayerNorm default
_SQRT1_2 = 1.0 / math.sqrt(2.0)
_GELU_C = math.sqrt(2.0 / math.pi)
_COMPUTE_DTYPE = jnp.bfloat16        # MXU-native matmul input dtype


# ----------------------------- in-kernel helpers ----------------------------


def _layernorm_f32(x, gamma, beta):
    mu = jnp.mean(x, axis=-1, keepdims=True)
    xc = x - mu
    var = jnp.mean(xc * xc, axis=-1, keepdims=True)
    return xc * lax.rsqrt(var + _LN_EPS) * gamma + beta


def _gelu_tanh(h):
    # tanh-approx GELU: transcendental goes to the EUP (separate bundle slot).
    # Max abs error vs exact erf GELU ~1e-3, well inside the bf16-level budget.
    return 0.5 * h * (1.0 + jnp.tanh(_GELU_C * (h + 0.044715 * h * h * h)))


# ----------------------------- fused kernel ---------------------------------


def _mixer_block2_kernel(x_ref,
                         g_t_ref, b_t_ref,            # token LN  (1, D)  f32
                         wt1_ref, bt1_ref,            # (Ht, N) bf16, (Ht, 1) f32
                         wt2_ref, bt2_ref,            # (N, Ht) bf16, (N, 1) f32
                         g_c_ref, b_c_ref,            # channel LN (1, D) f32
                         wc1_ref, bc1_ref,            # (D, Hc) bf16, (1, Hc) f32
                         wc2_ref, bc2_ref,            # (Hc, D) bf16, (1, D) f32
                         o_ref):
    x = x_ref[...].astype(jnp.float32)                               # (N, D)

    # ---- token mix (computed directly in (·, D) layout; contraction over N) --
    y = _layernorm_f32(x, g_t_ref[...], b_t_ref[...])                # (N, D)
    h = jnp.dot(wt1_ref[...], y.astype(wt1_ref.dtype),
                preferred_element_type=jnp.float32) + bt1_ref[...]   # (Ht, D)
    h = _gelu_tanh(h)
    tok = jnp.dot(wt2_ref[...], h.astype(wt2_ref.dtype),
                  preferred_element_type=jnp.float32) + bt2_ref[...]  # (N, D)
    x1 = x + tok                                                      # residual

    # ---- channel mix ---------------------------------------------------------
    y2 = _layernorm_f32(x1, g_c_ref[...], b_c_ref[...])              # (N, D)
    h2 = jnp.dot(y2.astype(wc1_ref.dtype), wc1_ref[...],
                 preferred_element_type=jnp.float32) + bc1_ref[...]  # (N, Hc)
    h2 = _gelu_tanh(h2)
    ch = jnp.dot(h2.astype(wc2_ref.dtype), wc2_ref[...],
                 preferred_element_type=jnp.float32) + bc2_ref[...]  # (N, D)

    o_ref[...] = (x1 + ch).astype(o_ref.dtype)


# ----------------------------- host-side setup -------------------------------


def prepare_params(params, compute_dtype=_COMPUTE_DTYPE):
    """One-time host-side parameter preparation (call OUTSIDE the hot loop):
      * merge the two FFN2 branches into single wider matmuls (exact math):
            W1m = [W1a | W1b]  (F, 2*Hq),  b1m = [b1a ; b1b]
            W2m = [W2a ; W2b]  (2*Hq, F),  b2m = b2a + b2b
      * pre-transpose the token-mix weights so the kernel contracts over N,
      * cast matmul weights to bf16, biases / LN params to f32 kernel shapes.
    Weights are stored (in, out) == PyTorch weight transposed."""
    def merged(net1, net2):
        w1 = jnp.concatenate([jnp.asarray(net1["w1"]), jnp.asarray(net2["w1"])], axis=1)
        b1 = jnp.concatenate([jnp.asarray(net1["b1"]), jnp.asarray(net2["b1"])], axis=0)
        w2 = jnp.concatenate([jnp.asarray(net1["w2"]), jnp.asarray(net2["w2"])], axis=0)
        b2 = jnp.asarray(net1["b2"]) + jnp.asarray(net2["b2"])
        return w1, b1, w2, b2

    wt1, bt1, wt2, bt2 = merged(params["token_net1"], params["token_net2"])
    wc1, bc1, wc2, bc2 = merged(params["channel_net1"], params["channel_net2"])
    D = params["ln_token"]["gamma"].shape[0]

    return {
        # token LayerNorm (normalizes over dim D)
        "g_t": jnp.asarray(params["ln_token"]["gamma"]).reshape(1, D).astype(jnp.float32),
        "b_t": jnp.asarray(params["ln_token"]["beta"]).reshape(1, D).astype(jnp.float32),
        # token FFN, pre-transposed for left-multiplication (contract over N)
        "wt1": wt1.T.astype(compute_dtype),                # (2*Hq_t, N)
        "bt1": bt1.reshape(-1, 1).astype(jnp.float32),     # (2*Hq_t, 1)
        "wt2": wt2.T.astype(compute_dtype),                # (N, 2*Hq_t)
        "bt2": bt2.reshape(-1, 1).astype(jnp.float32),     # (N, 1)
        # channel LayerNorm
        "g_c": jnp.asarray(params["ln_channel"]["gamma"]).reshape(1, D).astype(jnp.float32),
        "b_c": jnp.asarray(params["ln_channel"]["beta"]).reshape(1, D).astype(jnp.float32),
        # channel FFN (standard right-matmul layout)
        "wc1": wc1.astype(compute_dtype),                  # (D, 2*Hq_c)
        "bc1": bc1.reshape(1, -1).astype(jnp.float32),     # (1, 2*Hq_c)
        "wc2": wc2.astype(compute_dtype),                  # (2*Hq_c, D)
        "bc2": bc2.reshape(1, -1).astype(jnp.float32),     # (1, D)
    }


def _vmem_limit_bytes(needed_bytes):
    """Scoped VMEM limit sized from the real footprint, clamped to the device."""
    try:
        cap = int(pltpu.get_tpu_info().vmem_capacity_bytes)
    except Exception:
        cap = 64 * 1024 * 1024      # v7x per-TC VMEM; conservative fallback
    margin = 4 * 1024 * 1024        # Mosaic internal scratch headroom
    return int(min(int(cap * 0.9), max(16 * 1024 * 1024, needed_bytes + margin)))


def mixer_block2(x, p):
    """Mixerblock2 forward. x: (B, N, D) f32; p: output of prepare_params()."""
    B, N, D = x.shape
    Ht = p["wt1"].shape[0]          # 2 * token_dim // 4
    Hc = p["wc1"].shape[1]          # 2 * channel_dim // 4

    x_spec = pl.BlockSpec((None, N, D), lambda b: (b, 0, 0))

    consts = [p["g_t"], p["b_t"], p["wt1"], p["bt1"], p["wt2"], p["bt2"],
              p["g_c"], p["b_c"], p["wc1"], p["bc1"], p["wc2"], p["bc2"]]
    const_specs = [pl.BlockSpec(a.shape, lambda b: (0, 0)) for a in consts]

    # Cost estimate (per full call).
    flops = B * (4 * N * D * Ht + 4 * N * D * Hc + 16 * N * D)
    transcendentals = B * (Ht * D + N * Hc)
    w_bytes = sum(int(a.size) * a.dtype.itemsize for a in consts)
    io_bytes = B * N * D * (x.dtype.itemsize + 4)

    # VMEM footprint: double-buffered activations + (conservatively) double-
    # buffered grid-invariant weights + f32 in-kernel temporaries.
    act_buf = N * D * (x.dtype.itemsize + 4)
    tmp_bytes = 4 * (4 * N * D + Ht * D + N * Hc)
    vmem_needed = 2 * act_buf + 2 * w_bytes + tmp_bytes

    return pl.pallas_call(
        _mixer_block2_kernel,
        out_shape=jax.ShapeDtypeStruct((B, N, D), jnp.float32),
        grid_spec=pltpu.PrefetchScalarGridSpec(
            num_scalar_prefetch=0,
            grid=(B,),
            in_specs=[x_spec] + const_specs,
            out_specs=x_spec,
        ),
        compiler_params=pltpu.CompilerParams(
            dimension_semantics=("parallel",),
            vmem_limit_bytes=_vmem_limit_bytes(vmem_needed),
        ),
        cost_estimate=pl.CostEstimate(
            flops=flops,
            transcendentals=transcendentals,
            bytes_accessed=io_bytes + w_bytes,
        ),
    )(x, *consts)


# ----------------------------- pure-JAX reference ---------------------------


def _ln_ref(x, g, b):
    mu = x.mean(-1, keepdims=True)
    var = ((x - mu) ** 2).mean(-1, keepdims=True)
    return (x - mu) / jnp.sqrt(var + _LN_EPS) * g + b


def _ffn_ref(y, p):
    h = y @ p["w1"] + p["b1"]
    h = 0.5 * h * (1.0 + lax.erf(h * _SQRT1_2))     # exact erf GELU (nn.GELU default)
    return h @ p["w2"] + p["b2"]


def mixer_block2_ref(x, params):
    y = _ln_ref(x, params["ln_token"]["gamma"], params["ln_token"]["beta"])
    yT = jnp.transpose(y, (0, 2, 1))
    tok = _ffn_ref(yT, params["token_net1"]) + _ffn_ref(yT, params["token_net2"])
    x = x + jnp.transpose(tok, (0, 2, 1))
    y = _ln_ref(x, params["ln_channel"]["gamma"], params["ln_channel"]["beta"])
    ch = _ffn_ref(y, params["channel_net1"]) + _ffn_ref(y, params["channel_net2"])
    return x + ch


# ----------------------------- demo / test ----------------------------------


if __name__ == "__main__":
    # Mixerblock2(dim, num_patchs, token_dim, channel_dim), x: (B, num_patchs, dim)
    B, num_patchs, dim = 2, 16, 32
    token_dim, channel_dim = 64, 128

    key = jax.random.PRNGKey(0)
    keys = iter(jax.random.split(key, 32))

    def linear_params(fan_in, fan_out):
        lim = 1.0 / math.sqrt(fan_in)
        w = jax.random.uniform(next(keys), (fan_in, fan_out), jnp.float32, -lim, lim)
        b = jax.random.uniform(next(keys), (fan_out,), jnp.float32, -lim, lim)
        return {"w": w, "b": b}

    def ffn_branch(F, H):
        Hq = H // 4
        l1 = linear_params(F, Hq)
        l2 = linear_params(Hq, F)
        return {"w1": l1["w"], "b1": l1["b"], "w2": l2["w"], "b2": l2["b"]}

    def ln_params(F):
        return {"gamma": 1.0 + 0.1 * jax.random.normal(next(keys), (F,), jnp.float32),
                "beta": 0.1 * jax.random.normal(next(keys), (F,), jnp.float32)}

    def ema_mix(a, b, beta=0.99):
        # Simulates a trained state where net2 has drifted from net1 via EMA,
        # so the branch-merge optimization is exercised with net2 != net1.
        return {k: beta * a[k] + (1.0 - beta) * b[k] for k in a}

    token_net1 = ffn_branch(num_patchs, token_dim)
    token_net2 = ema_mix(token_net1, ffn_branch(num_patchs, token_dim))
    channel_net1 = ffn_branch(dim, channel_dim)
    channel_net2 = ema_mix(channel_net1, ffn_branch(dim, channel_dim))

    params = {
        "ln_token": ln_params(dim),
        "token_net1": token_net1, "token_net2": token_net2,
        "ln_channel": ln_params(dim),
        "channel_net1": channel_net1, "channel_net2": channel_net2,
    }

    x = jax.random.normal(next(keys), (B, num_patchs, dim), jnp.float32)

    # One-time parameter prep (branch merge + transpose + bf16 cast), then jit.
    prepped = prepare_params(params)
    mixer_fn = jax.jit(mixer_block2)

    out = mixer_fn(x, prepped)
    jax.block_until_ready(out)

    ref = mixer_block2_ref(x, params)
    err = float(jnp.max(jnp.abs(out - ref)))
    # bf16 matmul inputs (f32 accumulation) + tanh-GELU -> relaxed tolerance.
    assert jnp.allclose(out, ref, atol=5e-2, rtol=5e-2), f"max abs err {err}"

    print("KERNEL_OK")
</pallas_src>

<mosaic_0001>
module attributes {stable_mosaic.version = 11 : i64} {
  func.func @_mixer_block2_kernel(%arg0: i32, %arg1: memref<1x16x32xf32, #tpu.memory_space<vmem>>, %arg2: memref<1x32xf32, #tpu.memory_space<vmem>>, %arg3: memref<1x32xf32, #tpu.memory_space<vmem>>, %arg4: memref<32x16xbf16, #tpu.memory_space<vmem>>, %arg5: memref<32x1xf32, #tpu.memory_space<vmem>>, %arg6: memref<16x32xbf16, #tpu.memory_space<vmem>>, %arg7: memref<16x1xf32, #tpu.memory_space<vmem>>, %arg8: memref<1x32xf32, #tpu.memory_space<vmem>>, %arg9: memref<1x32xf32, #tpu.memory_space<vmem>>, %arg10: memref<32x64xbf16, #tpu.memory_space<vmem>>, %arg11: memref<1x64xf32, #tpu.memory_space<vmem>>, %arg12: memref<64x32xbf16, #tpu.memory_space<vmem>>, %arg13: memref<1x32xf32, #tpu.memory_space<vmem>>, %arg14: memref<1x16x32xf32, #tpu.memory_space<vmem>>) attributes {dimension_semantics = [#tpu.dimension_semantics<parallel>], iteration_bounds = array<i64: 2>, scalar_prefetch = 0 : i64, scratch_operands = 0 : i64, tpu.core_type = #tpu.core_type<tc>, window_params = [{transform_indices = @transform_0, window_bounds = array<i64: 1, 16, 32>}, {pipeline_mode = #tpu.pipeline_mode<synchronous>, transform_indices = @transform_1, window_bounds = array<i64: 1, 32>}, {pipeline_mode = #tpu.pipeline_mode<synchronous>, transform_indices = @transform_2, window_bounds = array<i64: 1, 32>}, {pipeline_mode = #tpu.pipeline_mode<synchronous>, transform_indices = @transform_3, window_bounds = array<i64: 32, 16>}, {pipeline_mode = #tpu.pipeline_mode<synchronous>, transform_indices = @transform_4, window_bounds = array<i64: 32, 1>}, {pipeline_mode = #tpu.pipeline_mode<synchronous>, transform_indices = @transform_5, window_bounds = array<i64: 16, 32>}, {pipeline_mode = #tpu.pipeline_mode<synchronous>, transform_indices = @transform_6, window_bounds = array<i64: 16, 1>}, {pipeline_mode = #tpu.pipeline_mode<synchronous>, transform_indices = @transform_7, window_bounds = array<i64: 1, 32>}, {pipeline_mode = #tpu.pipeline_mode<synchronous>, transform_indices = @transform_8, window_bounds = array<i64: 1, 32>}, {pipeline_mode = #tpu.pipeline_mode<synchronous>, transform_indices = @transform_9, window_bounds = array<i64: 32, 64>}, {pipeline_mode = #tpu.pipeline_mode<synchronous>, transform_indices = @transform_10, window_bounds = array<i64: 1, 64>}, {pipeline_mode = #tpu.pipeline_mode<synchronous>, transform_indices = @transform_11, window_bounds = array<i64: 64, 32>}, {pipeline_mode = #tpu.pipeline_mode<synchronous>, transform_indices = @transform_12, window_bounds = array<i64: 1, 32>}, {transform_indices = @transform_13, window_bounds = array<i64: 1, 16, 32>}]} {
    %c0 = arith.constant 0 : index
    %c0_0 = arith.constant 0 : index
    %c0_1 = arith.constant 0 : index
    %0 = vector.load %arg1[%c0, %c0_0, %c0_1] : memref<1x16x32xf32, #tpu.memory_space<vmem>>, vector<1x16x32xf32>
    %1 = vector.shape_cast %0 : vector<1x16x32xf32> to vector<16x32xf32>
    %c0_2 = arith.constant 0 : index
    %c0_3 = arith.constant 0 : index
    %2 = vector.load %arg2[%c0_2, %c0_3] : memref<1x32xf32, #tpu.memory_space<vmem>>, vector<1x32xf32>
    %c0_4 = arith.constant 0 : index
    %c0_5 = arith.constant 0 : index
    %3 = vector.load %arg3[%c0_4, %c0_5] : memref<1x32xf32, #tpu.memory_space<vmem>>, vector<1x32xf32>
    %cst = arith.constant dense<0.000000e+00> : vector<16xf32>
    %4 = vector.multi_reduction <add>, %1, %cst [1] : vector<16x32xf32> to vector<16xf32>
    %5 = vector.shape_cast %4 : vector<16xf32> to vector<16x1xf32>
    %cst_6 = arith.constant 3.200000e+01 : f32
    %6 = vector.broadcast %cst_6 : f32 to vector<16x1xf32>
    %7 = arith.divf %5, %6 : vector<16x1xf32>
    %8 = vector.broadcast %7 : vector<16x1xf32> to vector<16x32xf32>
    %9 = arith.subf %1, %8 : vector<16x32xf32>
    %10 = arith.mulf %9, %9 : vector<16x32xf32>
    %cst_7 = arith.constant dense<0.000000e+00> : vector<16xf32>
    %11 = vector.multi_reduction <add>, %10, %cst_7 [1] : vector<16x32xf32> to vector<16xf32>
    %12 = vector.shape_cast %11 : vector<16xf32> to vector<16x1xf32>
    %cst_8 = arith.constant 3.200000e+01 : f32
    %13 = vector.broadcast %cst_8 : f32 to vector<16x1xf32>
    %14 = arith.divf %12, %13 : vector<16x1xf32>
    %cst_9 = arith.constant 9.99999974E-6 : f32
    %15 = vector.broadcast %cst_9 : f32 to vector<16x1xf32>
    %16 = arith.addf %14, %15 : vector<16x1xf32>
    %17 = math.rsqrt %16 : vector<16x1xf32>
    %18 = vector.broadcast %17 : vector<16x1xf32> to vector<16x32xf32>
    %19 = arith.mulf %9, %18 : vector<16x32xf32>
    %20 = vector.broadcast %2 : vector<1x32xf32> to vector<16x32xf32>
    %21 = arith.mulf %19, %20 : vector<16x32xf32>
    %22 = vector.broadcast %3 : vector<1x32xf32> to vector<16x32xf32>
    %23 = arith.addf %21, %22 : vector<16x32xf32>
    %c0_10 = arith.constant 0 : index
    %c0_11 = arith.constant 0 : index
    %24 = vector.load %arg4[%c0_10, %c0_11] : memref<32x16xbf16, #tpu.memory_space<vmem>>, vector<32x16xbf16>
    %25 = arith.truncf %23 : vector<16x32xf32> to vector<16x32xbf16>
    %cst_12 = arith.constant dense<0.000000e+00> : vector<32x32xf32>
    %26 = tpu.matmul %24, %25, %cst_12 {dimension_numbers = #tpu.dot_dimension_numbers<[1], [0], [0], [1], [0, 0, 1, 1], [], []>} : vector<32x16xbf16>, vector<16x32xbf16>, vector<32x32xf32> -> vector<32x32xf32>
    %c0_13 = arith.constant 0 : index
    %c0_14 = arith.constant 0 : index
    %27 = vector.load %arg5[%c0_13, %c0_14] : memref<32x1xf32, #tpu.memory_space<vmem>>, vector<32x1xf32>
    %28 = vector.broadcast %27 : vector<32x1xf32> to vector<32x32xf32>
    %29 = arith.addf %26, %28 : vector<32x32xf32>
    %cst_15 = arith.constant 5.000000e-01 : f32
    %30 = vector.broadcast %cst_15 : f32 to vector<32x32xf32>
    %31 = arith.mulf %30, %29 : vector<32x32xf32>
    %cst_16 = arith.constant 4.471500e-02 : f32
    %32 = vector.broadcast %cst_16 : f32 to vector<32x32xf32>
    %33 = arith.mulf %32, %29 : vector<32x32xf32>
    %34 = arith.mulf %33, %29 : vector<32x32xf32>
    %35 = arith.mulf %34, %29 : vector<32x32xf32>
    %36 = arith.addf %29, %35 : vector<32x32xf32>
    %cst_17 = arith.constant 0.797884583 : f32
    %37 = vector.broadcast %cst_17 : f32 to vector<32x32xf32>
    %38 = arith.mulf %37, %36 : vector<32x32xf32>
    %39 = math.tanh %38 : vector<32x32xf32>
    %cst_18 = arith.constant 1.000000e+00 : f32
    %40 = vector.broadcast %cst_18 : f32 to vector<32x32xf32>
    %41 = arith.addf %40, %39 : vector<32x32xf32>
    %42 = arith.mulf %31, %41 : vector<32x32xf32>
    %c0_19 = arith.constant 0 : index
    %c0_20 = arith.constant 0 : index
    %43 = vector.load %arg6[%c0_19, %c0_20] : memref<16x32xbf16, #tpu.memory_space<vmem>>, vector<16x32xbf16>
    %44 = arith.truncf %42 : vector<32x32xf32> to vector<32x32xbf16>
    %cst_21 = arith.constant dense<0.000000e+00> : vector<16x32xf32>
    %45 = tpu.matmul %43, %44, %cst_21 {dimension_numbers = #tpu.dot_dimension_numbers<[1], [0], [0], [1], [0, 0, 1, 1], [], []>} : vector<16x32xbf16>, vector<32x32xbf16>, vector<16x32xf32> -> vector<16x32xf32>
    %c0_22 = arith.constant 0 : index
    %c0_23 = arith.constant 0 : index
    %46 = vector.load %arg7[%c0_22, %c0_23] : memref<16x1xf32, #tpu.memory_space<vmem>>, vector<16x1xf32>
    %47 = vector.broadcast %46 : vector<16x1xf32> to vector<16x32xf32>
    %48 = arith.addf %45, %47 : vector<16x32xf32>
    %49 = arith.addf %1, %48 : vector<16x32xf32>
    %c0_24 = arith.constant 0 : index
    %c0_25 = arith.constant 0 : index
    %50 = vector.load %arg8[%c0_24, %c0_25] : memref<1x32xf32, #tpu.memory_space<vmem>>, vector<1x32xf32>
    %c0_26 = arith.constant 0 : index
    %c0_27 = arith.constant 0 : index
    %51 = vector.load %arg9[%c0_26, %c0_27] : memref<1x32xf32, #tpu.memory_space<vmem>>, vector<1x32xf32>
    %cst_28 = arith.constant dense<0.000000e+00> : vector<16xf32>
    %52 = vector.multi_reduction <add>, %49, %cst_28 [1] : vector<16x32xf32> to vector<16xf32>
    %53 = vector.shape_cast %52 : vector<16xf32> to vector<16x1xf32>
    %cst_29 = arith.constant 3.200000e+01 : f32
    %54 = vector.broadcast %cst_29 : f32 to vector<16x1xf32>
    %55 = arith.divf %53, %54 : vector<16x1xf32>
    %56 = vector.broadcast %55 : vector<16x1xf32> to vector<16x32xf32>
    %57 = arith.subf %49, %56 : vector<16x32xf32>
    %58 = arith.mulf %57, %57 : vector<16x32xf32>
    %cst_30 = arith.constant dense<0.000000e+00> : vector<16xf32>
    %59 = vector.multi_reduction <add>, %58, %cst_30 [1] : vector<16x32xf32> to vector<16xf32>
    %60 = vector.shape_cast %59 : vector<16xf32> to vector<16x1xf32>
    %cst_31 = arith.constant 3.200000e+01 : f32
    %61 = vector.broadcast %cst_31 : f32 to vector<16x1xf32>
    %62 = arith.divf %60, %61 : vector<16x1xf32>
    %cst_32 = arith.constant 9.99999974E-6 : f32
    %63 = vector.broadcast %cst_32 : f32 to vector<16x1xf32>
    %64 = arith.addf %62, %63 : vector<16x1xf32>
    %65 = math.rsqrt %64 : vector<16x1xf32>
    %66 = vector.broadcast %65 : vector<16x1xf32> to vector<16x32xf32>
    %67 = arith.mulf %57, %66 : vector<16x32xf32>
    %68 = vector.broadcast %50 : vector<1x32xf32> to vector<16x32xf32>
    %69 = arith.mulf %67, %68 : vector<16x32xf32>
    %70 = vector.broadcast %51 : vector<1x32xf32> to vector<16x32xf32>
    %71 = arith.addf %69, %70 : vector<16x32xf32>
    %72 = arith.truncf %71 : vector<16x32xf32> to vector<16x32xbf16>
    %c0_33 = arith.constant 0 : index
    %c0_34 = arith.constant 0 : index
    %73 = vector.load %arg10[%c0_33, %c0_34] : memref<32x64xbf16, #tpu.memory_space<vmem>>, vector<32x64xbf16>
    %cst_35 = arith.constant dense<0.000000e+00> : vector<16x64xf32>
    %74 = tpu.matmul %72, %73, %cst_35 {dimension_numbers = #tpu.dot_dimension_numbers<[1], [0], [0], [1], [0, 0, 1, 1], [], []>} : vector<16x32xbf16>, vector<32x64xbf16>, vector<16x64xf32> -> vector<16x64xf32>
    %c0_36 = arith.constant 0 : index
    %c0_37 = arith.constant 0 : index
    %75 = vector.load %arg11[%c0_36, %c0_37] : memref<1x64xf32, #tpu.memory_space<vmem>>, vector<1x64xf32>
    %76 = vector.broadcast %75 : vector<1x64xf32> to vector<16x64xf32>
    %77 = arith.addf %74, %76 : vector<16x64xf32>
    %cst_38 = arith.constant 5.000000e-01 : f32
    %78 = vector.broadcast %cst_38 : f32 to vector<16x64xf32>
    %79 = arith.mulf %78, %77 : vector<16x64xf32>
    %cst_39 = arith.constant 4.471500e-02 : f32
    %80 = vector.broadcast %cst_39 : f32 to vector<16x64xf32>
    %81 = arith.mulf %80, %77 : vector<16x64xf32>
    %82 = arith.mulf %81, %77 : vector<16x64xf32>
    %83 = arith.mulf %82, %77 : vector<16x64xf32>
    %84 = arith.addf %77, %83 : vector<16x64xf32>
    %cst_40 = arith.constant 0.797884583 : f32
    %85 = vector.broadcast %cst_40 : f32 to vector<16x64xf32>
    %86 = arith.mulf %85, %84 : vector<16x64xf32>
    %87 = math.tanh %86 : vector<16x64xf32>
    %cst_41 = arith.constant 1.000000e+00 : f32
    %88 = vector.broadcast %cst_41 : f32 to vector<16x64xf32>
    %89 = arith.addf %88, %87 : vector<16x64xf32>
    %90 = arith.mulf %79, %89 : vector<16x64xf32>
    %91 = arith.truncf %90 : vector<16x64xf32> to vector<16x64xbf16>
    %c0_42 = arith.constant 0 : index
    %c0_43 = arith.constant 0 : index
    %92 = vector.load %arg12[%c0_42, %c0_43] : memref<64x32xbf16, #tpu.memory_space<vmem>>, vector<64x32xbf16>
    %cst_44 = arith.constant dense<0.000000e+00> : vector<16x32xf32>
    %93 = tpu.matmul %91, %92, %cst_44 {dimension_numbers = #tpu.dot_dimension_numbers<[1], [0], [0], [1], [0, 0, 1, 1], [], []>} : vector<16x64xbf16>, vector<64x32xbf16>, vector<16x32xf32> -> vector<16x32xf32>
    %c0_45 = arith.constant 0 : index
    %c0_46 = arith.constant 0 : index
    %94 = vector.load %arg13[%c0_45, %c0_46] : memref<1x32xf32, #tpu.memory_space<vmem>>, vector<1x32xf32>
    %95 = vector.broadcast %94 : vector<1x32xf32> to vector<16x32xf32>
    %96 = arith.addf %93, %95 : vector<16x32xf32>
    %97 = arith.addf %49, %96 : vector<16x32xf32>
    %c0_47 = arith.constant 0 : index
    %c0_48 = arith.constant 0 : index
    %c0_49 = arith.constant 0 : index
    %98 = vector.load %arg14[%c0_47, %c0_48, %c0_49] : memref<1x16x32xf32, #tpu.memory_space<vmem>>, vector<1x16x32xf32>
    %99 = vector.shape_cast %98 : vector<1x16x32xf32> to vector<16x32xf32>
    %100 = vector.shape_cast %97 : vector<16x32xf32> to vector<1x16x32xf32>
    tpu.vector_store %arg14[%c0_47, %c0_48, %c0_49], %100 {strides = array<i32>} : memref<1x16x32xf32, #tpu.memory_space<vmem>>, vector<1x16x32xf32>,
    return
  }
  func.func @transform_0(%arg0: i32) -> (i32, i32, i32) {
    %c0_i32 = arith.constant 0 : i32
    %c0_i32_0 = arith.constant 0 : i32
    %c0_i32_1 = arith.constant 0 : i32
    return %arg0, %c0_i32, %c0_i32_0 : i32, i32, i32
  }
  func.func @transform_1(%arg0: i32) -> (i32, i32) {
    %c0_i32 = arith.constant 0 : i32
    %c0_i32_0 = arith.constant 0 : i32
    %c0_i32_1 = arith.constant 0 : i32
    return %c0_i32, %c0_i32_0 : i32, i32
  }
  func.func @transform_2(%arg0: i32) -> (i32, i32) {
    %c0_i32 = arith.constant 0 : i32
    %c0_i32_0 = arith.constant 0 : i32
    %c0_i32_1 = arith.constant 0 : i32
    return %c0_i32, %c0_i32_0 : i32, i32
  }
  func.func @transform_3(%arg0: i32) -> (i32, i32) {
    %c0_i32 = arith.constant 0 : i32
    %c0_i32_0 = arith.constant 0 : i32
    %c0_i32_1 = arith.constant 0 : i32
    return %c0_i32, %c0_i32_0 : i32, i32
  }
  func.func @transform_4(%arg0: i32) -> (i32, i32) {
    %c0_i32 = arith.constant 0 : i32
    %c0_i32_0 = arith.constant 0 : i32
    %c0_i32_1 = arith.constant 0 : i32
    return %c0_i32, %c0_i32_0 : i32, i32
  }
  func.func @transform_5(%arg0: i32) -> (i32, i32) {
    %c0_i32 = arith.constant 0 : i32
    %c0_i32_0 = arith.constant 0 : i32
    %c0_i32_1 = arith.constant 0 : i32
    return %c0_i32, %c0_i32_0 : i32, i32
  }
  func.func @transform_6(%arg0: i32) -> (i32, i32) {
    %c0_i32 = arith.constant 0 : i32
    %c0_i32_0 = arith.constant 0 : i32
    %c0_i32_1 = arith.constant 0 : i32
    return %c0_i32, %c0_i32_0 : i32, i32
  }
  func.func @transform_7(%arg0: i32) -> (i32, i32) {
    %c0_i32 = arith.constant 0 : i32
    %c0_i32_0 = arith.constant 0 : i32
    %c0_i32_1 = arith.constant 0 : i32
    return %c0_i32, %c0_i32_0 : i32, i32
  }
  func.func @transform_8(%arg0: i32) -> (i32, i32) {
    %c0_i32 = arith.constant 0 : i32
    %c0_i32_0 = arith.constant 0 : i32
    %c0_i32_1 = arith.constant 0 : i32
    return %c0_i32, %c0_i32_0 : i32, i32
  }
  func.func @transform_9(%arg0: i32) -> (i32, i32) {
    %c0_i32 = arith.constant 0 : i32
    %c0_i32_0 = arith.constant 0 : i32
    %c0_i32_1 = arith.constant 0 : i32
    return %c0_i32, %c0_i32_0 : i32, i32
  }
  func.func @transform_10(%arg0: i32) -> (i32, i32) {
    %c0_i32 = arith.constant 0 : i32
    %c0_i32_0 = arith.constant 0 : i32
    %c0_i32_1 = arith.constant 0 : i32
    return %c0_i32, %c0_i32_0 : i32, i32
  }
  func.func @transform_11(%arg0: i32) -> (i32, i32) {
    %c0_i32 = arith.constant 0 : i32
    %c0_i32_0 = arith.constant 0 : i32
    %c0_i32_1 = arith.constant 0 : i32
    return %c0_i32, %c0_i32_0 : i32, i32
  }
  func.func @transform_12(%arg0: i32) -> (i32, i32) {
    %c0_i32 = arith.constant 0 : i32
    %c0_i32_0 = arith.constant 0 : i32
    %c0_i32_1 = arith.constant 0 : i32
    return %c0_i32, %c0_i32_0 : i32, i32
  }
  func.func @transform_13(%arg0: i32) -> (i32, i32, i32) {
    %c0_i32 = arith.constant 0 : i32
    %c0_i32_0 = arith.constant 0 : i32
    %c0_i32_1 = arith.constant 0 : i32
    return %arg0, %c0_i32, %c0_i32_0 : i32, i32, i32
  }
}

</mosaic_0001>

<llo_original>
// kernel: mixer_block2.1
$region0: #{mixer_block2.1}
  #allocation0 [shape = 'u32[]', space=smem, size = 0x4, offset = 0x4, fixed_abs, tag = 'smem constant byte address 0x4 - core index']
  #allocation1 [shape = 'u32[144,128]{1,0:T(1,128)}', space=vmem, size = 0x12000, scoped, tag = 'internal scratch']
  %s0 = inlined_call_operand.vmem [shape: f32[2,16,32], index: 0, kind: input, shape index: {}]
  %s1 = inlined_call_operand.vmem [shape: f32[1,32], index: 1, kind: input, shape index: {}]
  %s2 = inlined_call_operand.vmem [shape: f32[1,32], index: 2, kind: input, shape index: {}]
  %s3 = inlined_call_operand.vmem [shape: bf16[32,16], index: 3, kind: input, shape index: {}]
  %s4 = inlined_call_operand.vmem [shape: f32[32,1], index: 4, kind: input, shape index: {}]
  %s5 = inlined_call_operand.vmem [shape: bf16[16,32], index: 5, kind: input, shape index: {}]
  %s6 = inlined_call_operand.vmem [shape: f32[16,1], index: 6, kind: input, shape index: {}]
  %s7 = inlined_call_operand.vmem [shape: f32[1,32], index: 7, kind: input, shape index: {}]
  %s8 = inlined_call_operand.vmem [shape: f32[1,32], index: 8, kind: input, shape index: {}]
  %s9 = inlined_call_operand.vmem [shape: bf16[32,64], index: 9, kind: input, shape index: {}]
  %s10 = inlined_call_operand.vmem [shape: f32[1,64], index: 10, kind: input, shape index: {}]
  %s11 = inlined_call_operand.vmem [shape: bf16[64,32], index: 11, kind: input, shape index: {}]
  %s12 = inlined_call_operand.vmem [shape: f32[1,32], index: 12, kind: input, shape index: {}]
  %s13 = inlined_call_operand.hbm [shape: f32[2,16,32], index: 13, kind: output, shape index: {}]
  %s14 = sld [smem:[#allocation0]]
  $region85: #{mixer_block2.1} parent=0
    _
  %s16 = ssub.s32 1, %s14
  %s17 = scalar_select 0, %s16, %s14
  $region1: #{mixer_block2.1} parent=0
    #allocation2 [shape = 'u8[16384]{0}', space=vmem, size = 0x4000, scoped, tag = 'output window, operand 0']
    #allocation3 [shape = 's32[2]{0}', space=sflag, size = 0x8, scoped, tag = 'scoped memory for mixer_block2.1']
    %18 = vsyncpa [#allocation3], 0
    %s19 = scalar_lea.sflag [#allocation3], 1
    %20 = vsyncpa %s19, 0
    loop: start=0, step=1, limit=4
    $region2: #{mixer_block2.1} parent=1 // loop_pre_header
      _
    $region3: #{mixer_block2.1} parent=1 // loop_header
      %s22 = sphi 0, %s26
      %p23 = scmp.ge.s32.totalorder %s22, 4
      %s32 = sphi 0, %s34
      %s35 = sphi 0, %s32
      %s36 = sphi 0, %s35
      %s52 = sphi 0, %s36
      %s56 = sphi 0, %s56
      %s58 = sphi 0, %s56
      %s59 = sphi 0, %s58
      %s73 = sphi 0, %s59
      %s77 = sphi 0, %s77
      %s79 = sphi 0, %s77
      %s80 = sphi 0, %s79
      %s94 = sphi 0, %s80
      %s98 = sphi 0, %s98
      %s100 = sphi 0, %s98
      %s101 = sphi 0, %s100
      %s115 = sphi 0, %s101
      %s119 = sphi 0, %s119
      %s121 = sphi 0, %s119
      %s122 = sphi 0, %s121
      %s136 = sphi 0, %s122
      %s140 = sphi 0, %s140
      %s142 = sphi 0, %s140
      %s143 = sphi 0, %s142
      %s157 = sphi 0, %s143
      %s161 = sphi 0, %s161
      %s163 = sphi 0, %s161
      %s164 = sphi 0, %s163
      %s178 = sphi 0, %s164
      %s182 = sphi 0, %s182
      %s184 = sphi 0, %s182
      %s185 = sphi 0, %s184
      %s199 = sphi 0, %s185
      %s203 = sphi 0, %s203
      %s205 = sphi 0, %s203
      %s206 = sphi 0, %s205
      %s220 = sphi 0, %s206
      %s224 = sphi 0, %s224
      %s226 = sphi 0, %s224
      %s227 = sphi 0, %s226
      %s241 = sphi 0, %s227
      %s245 = sphi 0, %s245
      %s247 = sphi 0, %s245
      %s248 = sphi 0, %s247
      %s262 = sphi 0, %s248
      %s266 = sphi 0, %s266
      %s268 = sphi 0, %s266
      %s269 = sphi 0, %s268
      %s283 = sphi 0, %s269
      %s287 = sphi 0, %s287
      %s289 = sphi 0, %s287
      %s290 = sphi 0, %s289
      %s304 = sphi 0, %s290
      %s310 = sphi 0, %s312
      %s313 = sphi 0, %s310
      %s314 = sphi 0, %s313
      %s330 = sphi 0, %s314
    $region4: #{mixer_block2.1} parent=1 // loop_header_branch
      %25 = sbr.rel (%p23) target = $region8
    $region5: #{mixer_block2.1} parent=1 // loop_body
      %s27 = ssub.s32 %s22, 1
      %s28 = ssub.s32 %s22, 2
      %s29 = sadd.s32 %s22, 1
      %s30 = ssub.s32 %s22, %s29
      %p31 = scmp.eq.s32.totalorder %s30, 0
      %s33 = sadd.s32 %s32, 1
      %s34 = scalar_select %p31, %s32, %s33
      %p37 = pneg %p31
      %p38 = scmp.eq.s32.totalorder %s22, 1
      %p39 = por %p37, %p38
      %p40 = scmp.ne.s32.totalorder %s32, %s35
      %p41 = scmp.eq.s32.totalorder %s22, 0
      %p42 = por %p40, %p41
      %p43 = scmp.ne.s32.totalorder %s32, %s35
      %p44 = scmp.eq.s32.totalorder %s27, 1
      %p45 = por %p43, %p44
      %p46 = scmp.ne.s32.totalorder %s35, %s36
      %p47 = scmp.eq.s32.totalorder %s27, 0
      %p48 = por %p46, %p47
      %p49 = scmp.ne.s32.totalorder %s35, %s36
      %p50 = scmp.eq.s32.totalorder %s28, 1
      %p51 = por %p49, %p50
      %p53 = scmp.ne.s32.totalorder %s36, %s52
      %p54 = scmp.eq.s32.totalorder %s28, 0
      %p55 = por %p53, %p54
      %s57 = sadd.s32 %s56, 1
      %p60 = scmp.eq.s32.totalorder %s22, 1
      %p61 = scmp.ne.s32.totalorder %s56, %s58
      %p62 = scmp.eq.s32.totalorder %s22, 0
      %p63 = por %p61, %p62
      %p64 = scmp.ne.s32.totalorder %s56, %s58
      %p65 = scmp.eq.s32.totalorder %s27, 1
      %p66 = por %p64, %p65
      %p67 = scmp.ne.s32.totalorder %s58, %s59
      %p68 = scmp.eq.s32.totalorder %s27, 0
      %p69 = por %p67, %p68
      %p70 = scmp.ne.s32.totalorder %s58, %s59
      %p71 = scmp.eq.s32.totalorder %s28, 1
      %p72 = por %p70, %p71
      %p74 = scmp.ne.s32.totalorder %s59, %s73
      %p75 = scmp.eq.s32.totalorder %s28, 0
      %p76 = por %p74, %p75
      %s78 = sadd.s32 %s77, 1
      %p81 = scmp.eq.s32.totalorder %s22, 1
      %p82 = scmp.ne.s32.totalorder %s77, %s79
      %p83 = scmp.eq.s32.totalorder %s22, 0
      %p84 = por %p82, %p83
      %p85 = scmp.ne.s32.totalorder %s77, %s79
      %p86 = scmp.eq.s32.totalorder %s27, 1
      %p87 = por %p85, %p86
      %p88 = scmp.ne.s32.totalorder %s79, %s80
      %p89 = scmp.eq.s32.totalorder %s27, 0
      %p90 = por %p88, %p89
      %p91 = scmp.ne.s32.totalorder %s79, %s80
      %p92 = scmp.eq.s32.totalorder %s28, 1
      %p93 = por %p91, %p92
      %p95 = scmp.ne.s32.totalorder %s80, %s94
      %p96 = scmp.eq.s32.totalorder %s28, 0
      %p97 = por %p95, %p96
      %s99 = sadd.s32 %s98, 1
      %p102 = scmp.eq.s32.totalorder %s22, 1
      %p103 = scmp.ne.s32.totalorder %s98, %s100
      %p104 = scmp.eq.s32.totalorder %s22, 0
      %p105 = por %p103, %p104
      %p106 = scmp.ne.s32.totalorder %s98, %s100
      %p107 = scmp.eq.s32.totalorder %s27, 1
      %p108 = por %p106, %p107
      %p109 = scmp.ne.s32.totalorder %s100, %s101
      %p110 = scmp.eq.s32.totalorder %s27, 0
      %p111 = por %p109, %p110
      %p112 = scmp.ne.s32.totalorder %s100, %s101
      %p113 = scmp.eq.s32.totalorder %s28, 1
      %p114 = por %p112, %p113
      %p116 = scmp.ne.s32.totalorder %s101, %s115
      %p117 = scmp.eq.s32.totalorder %s28, 0
      %p118 = por %p116, %p117
      %s120 = sadd.s32 %s119, 1
      %p123 = scmp.eq.s32.totalorder %s22, 1
      %p124 = scmp.ne.s32.totalorder %s119, %s121
      %p125 = scmp.eq.s32.totalorder %s22, 0
      %p126 = por %p124, %p125
      %p127 = scmp.ne.s32.totalorder %s119, %s121
      %p128 = scmp.eq.s32.totalorder %s27, 1
      %p129 = por %p127, %p128
      %p130 = scmp.ne.s32.totalorder %s121, %s122
      %p131 = scmp.eq.s32.totalorder %s27, 0
      %p132 = por %p130, %p131
      %p133 = scmp.ne.s32.totalorder %s121, %s122
      %p134 = scmp.eq.s32.totalorder %s28, 1
      %p135 = por %p133, %p134
      %p137 = scmp.ne.s32.totalorder %s122, %s136
      %p138 = scmp.eq.s32.totalorder %s28, 0
      %p139 = por %p137, %p138
      %s141 = sadd.s32 %s140, 1
      %p144 = scmp.eq.s32.totalorder %s22, 1
      %p145 = scmp.ne.s32.totalorder %s140, %s142
      %p146 = scmp.eq.s32.totalorder %s22, 0
      %p147 = por %p145, %p146
      %p148 = scmp.ne.s32.totalorder %s140, %s142
      %p149 = scmp.eq.s32.totalorder %s27, 1
      %p150 = por %p148, %p149
      %p151 = scmp.ne.s32.totalorder %s142, %s143
      %p152 = scmp.eq.s32.totalorder %s27, 0
      %p153 = por %p151, %p152
      %p154 = scmp.ne.s32.totalorder %s142, %s143
      %p155 = scmp.eq.s32.totalorder %s28, 1
      %p156 = por %p154, %p155
      %p158 = scmp.ne.s32.totalorder %s143, %s157
      %p159 = scmp.eq.s32.totalorder %s28, 0
      %p160 = por %p158, %p159
      %s162 = sadd.s32 %s161, 1
      %p165 = scmp.eq.s32.totalorder %s22, 1
      %p166 = scmp.ne.s32.totalorder %s161, %s163
      %p167 = scmp.eq.s32.totalorder %s22, 0
      %p168 = por %p166, %p167
      %p169 = scmp.ne.s32.totalorder %s161, %s163
      %p170 = scmp.eq.s32.totalorder %s27, 1
      %p171 = por %p169, %p170
      %p172 = scmp.ne.s32.totalorder %s163, %s164
      %p173 = scmp.eq.s32.totalorder %s27, 0
      %p174 = por %p172, %p173
      %p175 = scmp.ne.s32.totalorder %s163, %s164
      %p176 = scmp.eq.s32.totalorder %s28, 1
      %p177 = por %p175, %p176
      %p179 = scmp.ne.s32.totalorder %s164, %s178
      %p180 = scmp.eq.s32.totalorder %s28, 0
      %p181 = por %p179, %p180
      %s183 = sadd.s32 %s182, 1
      %p186 = scmp.eq.s32.totalorder %s22, 1
      %p187 = scmp.ne.s32.totalorder %s182, %s184
      %p188 = scmp.eq.s32.totalorder %s22, 0
      %p189 = por %p187, %p188
      %p190 = scmp.ne.s32.totalorder %s182, %s184
      %p191 = scmp.eq.s32.totalorder %s27, 1
      %p192 = por %p190, %p191
      %p193 = scmp.ne.s32.totalorder %s184, %s185
      %p194 = scmp.eq.s32.totalorder %s27, 0
      %p195 = por %p193, %p194
      %p196 = scmp.ne.s32.totalorder %s184, %s185
      %p197 = scmp.eq.s32.totalorder %s28, 1
      %p198 = por %p196, %p197
      %p200 = scmp.ne.s32.totalorder %s185, %s199
      %p201 = scmp.eq.s32.totalorder %s28, 0
      %p202 = por %p200, %p201
      %s204 = sadd.s32 %s203, 1
      %p207 = scmp.eq.s32.totalorder %s22, 1
      %p208 = scmp.ne.s32.totalorder %s203, %s205
      %p209 = scmp.eq.s32.totalorder %s22, 0
      %p210 = por %p208, %p209
      %p211 = scmp.ne.s32.totalorder %s203, %s205
      %p212 = scmp.eq.s32.totalorder %s27, 1
      %p213 = por %p211, %p212
      %p214 = scmp.ne.s32.totalorder %s205, %s206
      %p215 = scmp.eq.s32.totalorder %s27, 0
      %p216 = por %p214, %p215
      %p217 = scmp.ne.s32.totalorder %s205, %s206
      %p218 = scmp.eq.s32.totalorder %s28, 1
      %p219 = por %p217, %p218
      %p221 = scmp.ne.s32.totalorder %s206, %s220
      %p222 = scmp.eq.s32.totalorder %s28, 0
      %p223 = por %p221, %p222
      %s225 = sadd.s32 %s224, 1
      %p228 = scmp.eq.s32.totalorder %s22, 1
      %p229 = scmp.ne.s32.totalorder %s224, %s226
      %p230 = scmp.eq.s32.totalorder %s22, 0
      %p231 = por %p229, %p230
      %p232 = scmp.ne.s32.totalorder %s224, %s226
      %p233 = scmp.eq.s32.totalorder %s27, 1
      %p234 = por %p232, %p233
      %p235 = scmp.ne.s32.totalorder %s226, %s227
      %p236 = scmp.eq.s32.totalorder %s27, 0
      %p237 = por %p235, %p236
      %p238 = scmp.ne.s32.totalorder %s226, %s227
      %p239 = scmp.eq.s32.totalorder %s28, 1
      %p240 = por %p238, %p239
      %p242 = scmp.ne.s32.totalorder %s227, %s241
      %p243 = scmp.eq.s32.totalorder %s28, 0
      %p244 = por %p242, %p243
      %s246 = sadd.s32 %s245, 1
      %p249 = scmp.eq.s32.totalorder %s22, 1
      %p250 = scmp.ne.s32.totalorder %s245, %s247
      %p251 = scmp.eq.s32.totalorder %s22, 0
      %p252 = por %p250, %p251
      %p253 = scmp.ne.s32.totalorder %s245, %s247
      %p254 = scmp.eq.s32.totalorder %s27, 1
      %p255 = por %p253, %p254
      %p256 = scmp.ne.s32.totalorder %s247, %s248
      %p257 = scmp.eq.s32.totalorder %s27, 0
      %p258 = por %p256, %p257
      %p259 = scmp.ne.s32.totalorder %s247, %s248
      %p260 = scmp.eq.s32.totalorder %s28, 1
      %p261 = por %p259, %p260
      %p263 = scmp.ne.s32.totalorder %s248, %s262
      %p264 = scmp.eq.s32.totalorder %s28, 0
      %p265 = por %p263, %p264
      %s267 = sadd.s32 %s266, 1
      %p270 = scmp.eq.s32.totalorder %s22, 1
      %p271 = scmp.ne.s32.totalorder %s266, %s268
      %p272 = scmp.eq.s32.totalorder %s22, 0
      %p273 = por %p271, %p272
      %p274 = scmp.ne.s32.totalorder %s266, %s268
      %p275 = scmp.eq.s32.totalorder %s27, 1
      %p276 = por %p274, %p275
      %p277 = scmp.ne.s32.totalorder %s268, %s269
      %p278 = scmp.eq.s32.totalorder %s27, 0
      %p279 = por %p277, %p278
      %p280 = scmp.ne.s32.totalorder %s268, %s269
      %p281 = scmp.eq.s32.totalorder %s28, 1
      %p282 = por %p280, %p281
      %p284 = scmp.ne.s32.totalorder %s269, %s283
      %p285 = scmp.eq.s32.totalorder %s28, 0
      %p286 = por %p284, %p285
      %s288 = sadd.s32 %s287, 1
      %p291 = scmp.eq.s32.totalorder %s22, 1
      %p292 = scmp.ne.s32.totalorder %s287, %s289
      %p293 = scmp.eq.s32.totalorder %s22, 0
      %p294 = por %p292, %p293
      %p295 = scmp.ne.s32.totalorder %s287, %s289
      %p296 = scmp.eq.s32.totalorder %s27, 1
      %p297 = por %p295, %p296
      %p298 = scmp.ne.s32.totalorder %s289, %s290
      %p299 = scmp.eq.s32.totalorder %s27, 0
      %p300 = por %p298, %p299
      %p301 = scmp.ne.s32.totalorder %s289, %s290
      %p302 = scmp.eq.s32.totalorder %s28, 1
      %p303 = por %p301, %p302
      %p305 = scmp.ne.s32.totalorder %s290, %s304
      %p306 = scmp.eq.s32.totalorder %s28, 0
      %p307 = por %p305, %p306
      %s308 = ssub.s32 %s22, %s29
      %p309 = scmp.eq.s32.totalorder %s308, 0
      %s311 = sadd.s32 %s310, 1
      %s312 = scalar_select %p309, %s310, %s311
      %p315 = pneg %p309
      %p316 = scmp.eq.s32.totalorder %s22, 1
      %p317 = por %p315, %p316
      %p318 = scmp.ne.s32.totalorder %s310, %s313
      %p319 = scmp.eq.s32.totalorder %s22, 0
      %p320 = por %p318, %p319
      %p321 = scmp.ne.s32.totalorder %s310, %s313
      %p322 = scmp.eq.s32.totalorder %s27, 1
      %p323 = por %p321, %p322
      %p324 = scmp.ne.s32.totalorder %s313, %s314
      %p325 = scmp.eq.s32.totalorder %s27, 0
      %p326 = por %p324, %p325
      %p327 = scmp.ne.s32.totalorder %s313, %s314
      %p328 = scmp.eq.s32.totalorder %s28, 1
      %p329 = por %p327, %p328
      %p331 = scmp.ne.s32.totalorder %s314, %s330
      %p332 = scmp.eq.s32.totalorder %s28, 0
      %p333 = por %p331, %p332
      %p334 = scmp.le.s32.totalorder 1, %s22
      %p335 = scmp.lt.s32.totalorder %s22, 3
      %p336 = pnand %p334, %p335
      %p337 = pneg %p336
      // Predicated region
      $region9: #{mixer_block2.1} parent=5 // pred_check
        _
      $region10: #{mixer_block2.1} parent=5 // pred_check_branch
        %339 = sbr.rel (%p336) target = $region12
      $region11: #{mixer_block2.1} parent=5 // pred_region
        %s340 = ssub.s32 %s22, 1
        // Predicated region
        $region13: #{mixer_block2.1} parent=11 // pred_check
          %p341 = pneg %p69
        $region14: #{mixer_block2.1} parent=11 // pred_check_branch
          %343 = sbr.rel (%p341) target = $region16
        $region15: #{mixer_block2.1} parent=11 // pred_region
          _
        $region16: #{mixer_block2.1} parent=11 // pred_fallthru
          _
        // Predicated region
        $region17: #{mixer_block2.1} parent=11 // pred_check
          %p344 = pneg %p90
        $region18: #{mixer_block2.1} parent=11 // pred_check_branch
          %346 = sbr.rel (%p344) target = $region20
        $region19: #{mixer_block2.1} parent=11 // pred_region
          _
        $region20: #{mixer_block2.1} parent=11 // pred_fallthru
          _
        // Predicated region
        $region21: #{mixer_block2.1} parent=11 // pred_check
          %p347 = pneg %p111
        $region22: #{mixer_block2.1} parent=11 // pred_check_branch
          %349 = sbr.rel (%p347) target = $region24
        $region23: #{mixer_block2.1} parent=11 // pred_region
          _
        $region24: #{mixer_block2.1} parent=11 // pred_fallthru
          _
        // Predicated region
        $region25: #{mixer_block2.1} parent=11 // pred_check
          %p350 = pneg %p132
        $region26: #{mixer_block2.1} parent=11 // pred_check_branch
          %352 = sbr.rel (%p350) target = $region28
        $region27: #{mixer_block2.1} parent=11 // pred_region
          _
        $region28: #{mixer_block2.1} parent=11 // pred_fallthru
          _
        // Predicated region
        $region29: #{mixer_block2.1} parent=11 // pred_check
          %p353 = pneg %p153
        $region30: #{mixer_block2.1} parent=11 // pred_check_branch
          %355 = sbr.rel (%p353) target = $region32
        $region31: #{mixer_block2.1} parent=11 // pred_region
          _
        $region32: #{mixer_block2.1} parent=11 // pred_fallthru
          _
        // Predicated region
        $region33: #{mixer_block2.1} parent=11 // pred_check
          %p356 = pneg %p174
        $region34: #{mixer_block2.1} parent=11 // pred_check_branch
          %358 = sbr.rel (%p356) target = $region36
        $region35: #{mixer_block2.1} parent=11 // pred_region
          _
        $region36: #{mixer_block2.1} parent=11 // pred_fallthru
          _
        // Predicated region
        $region37: #{mixer_block2.1} parent=11 // pred_check
          %p359 = pneg %p195
        $region38: #{mixer_block2.1} parent=11 // pred_check_branch
          %361 = sbr.rel (%p359) target = $region40
        $region39: #{mixer_block2.1} parent=11 // pred_region
          _
        $region40: #{mixer_block2.1} parent=11 // pred_fallthru
          _
        // Predicated region
        $region41: #{mixer_block2.1} parent=11 // pred_check
          %p362 = pneg %p216
        $region42: #{mixer_block2.1} parent=11 // pred_check_branch
          %364 = sbr.rel (%p362) target = $region44
        $region43: #{mixer_block2.1} parent=11 // pred_region
          _
        $region44: #{mixer_block2.1} parent=11 // pred_fallthru
          _
        // Predicated region
        $region45: #{mixer_block2.1} parent=11 // pred_check
          %p365 = pneg %p237
        $region46: #{mixer_block2.1} parent=11 // pred_check_branch
          %367 = sbr.rel (%p365) target = $region48
        $region47: #{mixer_block2.1} parent=11 // pred_region
          _
        $region48: #{mixer_block2.1} parent=11 // pred_fallthru
          _
        // Predicated region
        $region49: #{mixer_block2.1} parent=11 // pred_check
          %p368 = pneg %p258
        $region50: #{mixer_block2.1} parent=11 // pred_check_branch
          %370 = sbr.rel (%p368) target = $region52
        $region51: #{mixer_block2.1} parent=11 // pred_region
          _
        $region52: #{mixer_block2.1} parent=11 // pred_fallthru
          _
        // Predicated region
        $region53: #{mixer_block2.1} parent=11 // pred_check
          %p371 = pneg %p279
        $region54: #{mixer_block2.1} parent=11 // pred_check_branch
          %373 = sbr.rel (%p371) target = $region56
        $region55: #{mixer_block2.1} parent=11 // pred_region
          _
        $region56: #{mixer_block2.1} parent=11 // pred_fallthru
          _
        // Predicated region
        $region57: #{mixer_block2.1} parent=11 // pred_check
          %p374 = pneg %p300
        $region58: #{mixer_block2.1} parent=11 // pred_check_branch
          %376 = sbr.rel (%p374) target = $region60
        $region59: #{mixer_block2.1} parent=11 // pred_region
          _
        $region60: #{mixer_block2.1} parent=11 // pred_fallthru
          _
      $region12: #{mixer_block2.1} parent=5 // pred_fallthru
        _
      %p377 = scmp.lt.s32.totalorder %s22, 2
      // Predicated region
      $region61: #{mixer_block2.1} parent=5 // pred_check
        %p378 = pneg %p377
      $region62: #{mixer_block2.1} parent=5 // pred_check_branch
        %380 = sbr.rel (%p378) target = $region64
      $region63: #{mixer_block2.1} parent=5 // pred_region
        // Predicated region
        $region65: #{mixer_block2.1} parent=63 // pred_check
          %p381 = pneg %p42
        $region66: #{mixer_block2.1} parent=63 // pred_check_branch
          %383 = sbr.rel (%p381) target = $region68
        $region67: #{mixer_block2.1} parent=63 // pred_region
          %p384 = scmp.lt.s32.totalorder %s22, 1
          %s385 = scalar_select %p384, %s22, 1
          %s386 = smul.addr %s385, 2
          %s387 = smul.addr %s386, 8
          %s388 = scalar_lea.vmem %s0, %s387
        $region68: #{mixer_block2.1} parent=63 // pred_fallthru
          _
      $region64: #{mixer_block2.1} parent=5 // pred_fallthru
        _
      %p389 = scmp.le.s32.totalorder 1, %s22
      %p390 = scmp.lt.s32.totalorder %s22, 3
      %p391 = pnand %p389, %p390
      %p392 = pneg %p391
      // Predicated region
      $region69: #{mixer_block2.1} parent=5 // pred_check
        _
      $region70: #{mixer_block2.1} parent=5 // pred_check_branch
        %394 = sbr.rel (%p391) target = $region72
      $region71: #{mixer_block2.1} parent=5 // pred_region
        %s395 = ssub.s32 %s22, 1
        %p396 = scmp.lt.s32.totalorder %s27, 1
        %s397 = scalar_select %p396, %s27, 1
        %s398 = smul.addr %s397, 2
        %s399 = smul.addr %s398, 8
        %s400 = scalar_lea.vmem %s0, %s399
        %p401 = pneg %p48
        %p402 = pneg %p45
        %p403 = pneg %p69
        %p404 = pneg %p66
        %p405 = pneg %p90
        %p406 = pneg %p87
        %p407 = pneg %p111
        %p408 = pneg %p108
        %p409 = pneg %p132
        %p410 = pneg %p129
        %p411 = pneg %p153
        %p412 = pneg %p150
        %p413 = pneg %p174
        %p414 = pneg %p171
        %p415 = pneg %p195
        %p416 = pneg %p192
        %p417 = pneg %p216
        %p418 = pneg %p213
        %p419 = pneg %p237
        %p420 = pneg %p234
        %p421 = pneg %p258
        %p422 = pneg %p255
        %p423 = pneg %p279
        %p424 = pneg %p276
        %p425 = pneg %p300
        %p426 = pneg %p297
        %p427 = pneg %p326
        %p428 = pneg %p323
        %s429 = sand.u32 %s313, 1
        %s430 = scalar_lea.sflag [#allocation3], %s429
        %s431 = sand.u32 %s313, 1
        %s432 = smul.addr %s431, 16
        %s433 = scalar_lea.vmem [#allocation2], %s432
        %p434 = scmp.lt.s32.totalorder %s27, 1
        %s435 = scalar_select %p434, %s27, 1
        %s436 = smul.addr %s435, 2
        %s437 = smul.addr %s436, 8
        %s438 = scalar_lea.vmem %s0, %s437
        %v440 = vld [vmem:[%s438] sm:$0xff]
        %v441 = vld [vmem:[%s438 + $0x8] sm:$0xff]
        %v442 = vld [vmem:[%s1] sm:$0x1]
        %v443 = vld [vmem:[%s2] sm:$0x1]
        %vm444 = vcmask 261120
        %v445 = vsel %vm444, %v440, 0.0
        %446 = vadd.xlane.f32.xlu0 %v445
        %v447 = vpop.xlane.xlu0 %446
        %v448 = vsel %vm444, %v441, 0.0
        %449 = vadd.xlane.f32.xlu0 %v448
        %v450 = vpop.xlane.xlu0 %449
        %v451 = vrcp.pop 32.0
        %v452 = vmul.f32 %v447, %v451
        %v453 = vmul.f32 %v450, %v451
        %v454 = vsub.f32 %v440, %v452
        %v455 = vsub.f32 %v441, %v453
        %v456 = vmul.f32 %v454, %v454
        %v457 = vmul.f32 %v455, %v455
        %v458 = vsel %vm444, %v456, 0.0
        %459 = vadd.xlane.f32.xlu0 %v458
        %v460 = vpop.xlane.xlu0 %459
        %v461 = vsel %vm444, %v457, 0.0
        %462 = vadd.xlane.f32.xlu0 %v461
        %v463 = vpop.xlane.xlu0 %462
        %v464 = vmul.f32 %v460, %v451
        %v465 = vmul.f32 %v463, %v451
        %v466 = vadd.f32 %v464, 1e-05
        %v467 = vadd.f32 %v465, 1e-05
        %v468 = vrsqrt.pop %v466
        %v469 = vrsqrt.pop %v467
        %v470 = vmul.f32 %v454, %v468
        %v471 = vmul.f32 %v455, %v469
        %v473 = vlaneseq
        %v474 = vshrl.u32 %v473, 7
        %v475 = vsub.s32 0, %v474
        %v476 = vrot.slane %v442, %v475
        %v478 = vmul.f32 %v470, %v476
        %v479 = vmul.f32 %v471, %v476
        %v481 = vlaneseq
        %v482 = vshrl.u32 %v481, 7
        %v483 = vsub.s32 0, %v482
        %v484 = vrot.slane %v443, %v483
        %v486 = vadd.f32 %v478, %v484
        %v487 = vadd.f32 %v479, %v484
        %v488 = vld [vmem:[%s3] sm:$0xf]
        %v489 = vld [vmem:[%s3 + $0x4] sm:$0xf]
        %v490 = vld [vmem:[%s3 + $0x8] sm:$0xf]
        %v491 = vld [vmem:[%s3 + $0xc] sm:$0xf]
        %v492 = vpack.c.bf16 %v487, %v486
        %v493 = vld [vmem:[%s4] sm:$0xff]
        %v494 = vld [vmem:[%s4 + $0x8] sm:$0xff]
        %v495 = vld [vmem:[%s4 + $0x10] sm:$0xff]
        %v496 = vld [vmem:[%s4 + $0x18] sm:$0xff]
        %498 = vset.pattern.permute.xlu0 0
        %499 = vperm.xlu0 %498, %v493
        %v500 = vpop.permute.xlu0 %499
        %503 = vset.pattern.permute.xlu0 0
        %504 = vperm.xlu0 %503, %v494
        %v505 = vpop.permute.xlu0 %504
        %508 = vset.pattern.permute.xlu0 0
        %509 = vperm.xlu0 %508, %v495
        %v510 = vpop.permute.xlu0 %509
        %513 = vset.pattern.permute.xlu0 0
        %514 = vperm.xlu0 %513, %v496
        %v515 = vpop.permute.xlu0 %514
        %v521 = vunpack.c.l.b16 %v488
        %v522 = vunpack.c.l.b16 %v489
        %v523 = vunpack.c.l.b16 %v490
        %v524 = vunpack.c.l.b16 %v491
        %v525 = vpack.c.b16 %v522, %v521
        %v526 = vpack.c.b16 %v524, %v523
        %vm527 = vcmask 130048
        %v529 = vsel %vm527, %v525, 0
        %v532 = vsel %vm527, %v526, 0
        %534 = vmatprep.subr.bf16.mxu0 0
        %535 = vmatpush1.bf16.msra.mxu0 %v492
        %536 = vmatprep.subr.bf16.mxu0 0
        %537 = vmatpush1.bf16.msra.mxu0 0
        %538 = vmatprep.subr.bf16.mxu0 0
        %539 = vmatpush1.bf16.msra.mxu0 0
        %540 = vmatprep.subr.bf16.mxu0 0
        %541 = vmatpush1.bf16.msra.mxu0 0
        %542 = vmatprep.subr.bf16.mxu0 0
        %543 = vmatpush1.bf16.msra.mxu0 0
        %544 = vmatprep.subr.bf16.mxu0 0
        %545 = vmatpush1.bf16.msra.mxu0 0
        %546 = vmatprep.subr.bf16.mxu0 0
        %547 = vmatpush1.bf16.msra.mxu0 0
        %548 = vmatprep.subr.bf16.mxu0 0
        %549 = vmatpush1.bf16.msra.mxu0 0
        %550 = vmatprep.subr.bf16.mxu0 0
        %551 = vmatpush1.bf16.msra.mxu0 0
        %552 = vmatprep.subr.bf16.mxu0 0
        %553 = vmatpush1.bf16.msra.mxu0 0
        %554 = vmatprep.subr.bf16.mxu0 0
        %555 = vmatpush1.bf16.msra.mxu0 0
        %556 = vmatprep.subr.bf16.mxu0 0
        %557 = vmatpush1.bf16.msra.mxu0 0
        %558 = vmatprep.subr.bf16.mxu0 0
        %559 = vmatpush1.bf16.msra.mxu0 0
        %560 = vmatprep.subr.bf16.mxu0 0
        %561 = vmatpush1.bf16.msra.mxu0 0
        %562 = vmatprep.subr.bf16.mxu0 0
        %563 = vmatpush1.bf16.msra.mxu0 0
        %564 = vmatprep.subr.bf16.mxu0 0
        %565 = vmatpush1.bf16.msra.mxu0 0
        %566 = vmatprep.mubr.bf16.mxu0 0
        %567 = vmatmul.mubr.bf16.gmra.mrb[0].mxu0 %v529
        %v568 = vpop.f32.mrb[0].mxu0
        %v569 = vadd.f32 %v500, %v568
        %v570 = vpop.f32.mrb[0].mxu0
        %v571 = vpop.f32.mrb[0].mxu0
        %v572 = vadd.f32 %v505, %v571
        %v573 = vpop.f32.mrb[0].mxu0
        %574 = vmatprep.mubr.bf16.mxu0 0
        %575 = vmatmul.mubr.bf16.gmra.mrb[0].mxu0 %v532
        %v576 = vpop.f32.mrb[0].mxu0
        %v577 = vadd.f32 %v510, %v576
        %v578 = vpop.f32.mrb[0].mxu0
        %v579 = vpop.f32.mrb[0].mxu0
        %v580 = vadd.f32 %v515, %v579
        %v581 = vpop.f32.mrb[0].mxu0
        %582 = vdwg.mxu0
        %v583 = vmul.f32 %v569, 0.5
        %v584 = vmul.f32 %v572, 0.5
        %v585 = vmul.f32 %v577, 0.5
        %v586 = vmul.f32 %v580, 0.5
        %v587 = vmul.f32 %v569, 0.044715
        %v588 = vmul.f32 %v572, 0.044715
        %v589 = vmul.f32 %v577, 0.044715
        %v590 = vmul.f32 %v580, 0.044715
        %v591 = vmul.f32 %v587, %v569
        %v592 = vmul.f32 %v588, %v572
        %v593 = vmul.f32 %v589, %v577
        %v594 = vmul.f32 %v590, %v580
        %v595 = vmul.f32 %v591, %v569
        %v596 = vmul.f32 %v592, %v572
        %v597 = vmul.f32 %v593, %v577
        %v598 = vmul.f32 %v594, %v580
        %v599 = vadd.f32 %v569, %v595
        %v600 = vadd.f32 %v572, %v596
        %v601 = vadd.f32 %v577, %v597
        %v602 = vadd.f32 %v580, %v598
        %v603 = vmul.f32 %v599, 0.7978846
        %v604 = vmul.f32 %v600, 0.7978846
        %v605 = vmul.f32 %v601, 0.7978846
        %v606 = vmul.f32 %v602, 0.7978846
        %v607 = vtanh.pop %v603
        %v608 = vtanh.pop %v604
        %v609 = vtanh.pop %v605
        %v610 = vtanh.pop %v606
        %v611 = vadd.f32 %v607, 1.0
        %v612 = vadd.f32 %v608, 1.0
        %v613 = vadd.f32 %v609, 1.0
        %v614 = vadd.f32 %v610, 1.0
        %v615 = vmul.f32 %v583, %v611
        %v616 = vmul.f32 %v584, %v612
        %v617 = vmul.f32 %v585, %v613
        %v618 = vmul.f32 %v586, %v614
        %v619 = vld [vmem:[%s5] sm:$0xf]
        %v620 = vld [vmem:[%s5 + $0x4] sm:$0xf]
        %v621 = vpack.c.bf16 %v616, %v615
        %v622 = vpack.c.bf16 %v618, %v617
        %v623 = vld [vmem:[%s6] sm:$0xff]
        %v624 = vld [vmem:[%s6 + $0x8] sm:$0xff]
        %626 = vset.pattern.permute.xlu0 0
        %627 = vperm.xlu0 %626, %v623
        %v628 = vpop.permute.xlu0 %627
        %631 = vset.pattern.permute.xlu0 0
        %632 = vperm.xlu0 %631, %v624
        %v633 = vpop.permute.xlu0 %632
        %v637 = vunpack.c.l.b16 %v619
        %v638 = vunpack.c.l.b16 %v620
        %v639 = vpack.c.b16 %v638, %v637
        %v641 = vsel %vm444, %v639, 0
        %643 = vmatprep.subr.bf16.mxu0 0
        %644 = vmatpush1.bf16.msra.mxu0 %v621
        %645 = vmatprep.subr.bf16.mxu0 0
        %646 = vmatpush1.bf16.msra.mxu0 %v622
        %647 = vmatprep.subr.bf16.mxu0 0
        %648 = vmatpush1.bf16.msra.mxu0 0
        %649 = vmatprep.subr.bf16.mxu0 0
        %650 = vmatpush1.bf16.msra.mxu0 0
        %651 = vmatprep.subr.bf16.mxu0 0
        %652 = vmatpush1.bf16.msra.mxu0 0
        %653 = vmatprep.subr.bf16.mxu0 0
        %654 = vmatpush1.bf16.msra.mxu0 0
        %655 = vmatprep.subr.bf16.mxu0 0
        %656 = vmatpush1.bf16.msra.mxu0 0
        %657 = vmatprep.subr.bf16.mxu0 0
        %658 = vmatpush1.bf16.msra.mxu0 0
        %659 = vmatprep.subr.bf16.mxu0 0
        %660 = vmatpush1.bf16.msra.mxu0 0
        %661 = vmatprep.subr.bf16.mxu0 0
        %662 = vmatpush1.bf16.msra.mxu0 0
        %663 = vmatprep.subr.bf16.mxu0 0
        %664 = vmatpush1.bf16.msra.mxu0 0
        %665 = vmatprep.subr.bf16.mxu0 0
        %666 = vmatpush1.bf16.msra.mxu0 0
        %667 = vmatprep.subr.bf16.mxu0 0
        %668 = vmatpush1.bf16.msra.mxu0 0
        %669 = vmatprep.subr.bf16.mxu0 0
        %670 = vmatpush1.bf16.msra.mxu0 0
        %671 = vmatprep.subr.bf16.mxu0 0
        %672 = vmatpush1.bf16.msra.mxu0 0
        %673 = vmatprep.subr.bf16.mxu0 0
        %674 = vmatpush1.bf16.msra.mxu0 0
        %675 = vmatprep.mubr.bf16.mxu0 0
        %676 = vmatmul.mubr.bf16.gmra.mrb[0].mxu0 %v641
        %v677 = vpop.f32.mrb[0].mxu0
        %v678 = vadd.f32 %v628, %v677
        %v679 = vpop.f32.mrb[0].mxu0
        %v680 = vpop.f32.mrb[0].mxu0
        %v681 = vadd.f32 %v633, %v680
        %v682 = vpop.f32.mrb[0].mxu0
        %683 = vdwg.mxu0
        %v684 = vadd.f32 %v440, %v678
        %v685 = vadd.f32 %v441, %v681
        %v686 = vld [vmem:[%s7] sm:$0x1]
        %v687 = vld [vmem:[%s8] sm:$0x1]
        %v688 = vsel %vm444, %v684, 0.0
        %689 = vadd.xlane.f32.xlu0 %v688
        %v690 = vpop.xlane.xlu0 %689
        %v691 = vsel %vm444, %v685, 0.0
        %692 = vadd.xlane.f32.xlu0 %v691
        %v693 = vpop.xlane.xlu0 %692
        %v694 = vmul.f32 %v690, %v451
        %v695 = vmul.f32 %v693, %v451
        %v696 = vsub.f32 %v684, %v694
        %v697 = vsub.f32 %v685, %v695
        %v698 = vmul.f32 %v696, %v696
        %v699 = vmul.f32 %v697, %v697
        %v700 = vsel %vm444, %v698, 0.0
        %701 = vadd.xlane.f32.xlu0 %v700
        %v702 = vpop.xlane.xlu0 %701
        %v703 = vsel %vm444, %v699, 0.0
        %704 = vadd.xlane.f32.xlu0 %v703
        %v705 = vpop.xlane.xlu0 %704
        %v706 = vmul.f32 %v702, %v451
        %v707 = vmul.f32 %v705, %v451
        %v708 = vadd.f32 %v706, 1e-05
        %v709 = vadd.f32 %v707, 1e-05
        %v710 = vrsqrt.pop %v708
        %v711 = vrsqrt.pop %v709
        %v712 = vmul.f32 %v696, %v710
        %v713 = vmul.f32 %v697, %v711
        %v715 = vlaneseq
        %v716 = vshrl.u32 %v715, 7
        %v717 = vsub.s32 0, %v716
        %v718 = vrot.slane %v686, %v717
        %v720 = vmul.f32 %v712, %v718
        %v721 = vmul.f32 %v713, %v718
        %v723 = vlaneseq
        %v724 = vshrl.u32 %v723, 7
        %v725 = vsub.s32 0, %v724
        %v726 = vrot.slane %v687, %v725
        %v728 = vadd.f32 %v720, %v726
        %v729 = vadd.f32 %v721, %v726
        %v730 = vpack.c.bf16 %v729, %v728
        %v731 = vld [vmem:[%s9] sm:$0xf]
        %v732 = vld [vmem:[%s9 + $0x4] sm:$0xf]
        %v733 = vld [vmem:[%s9 + $0x8] sm:$0xf]
        %v734 = vld [vmem:[%s9 + $0xc] sm:$0xf]
        %v735 = vld [vmem:[%s10] sm:$0x1]
        %v737 = vlaneseq
        %v738 = vshrl.u32 %v737, 7
        %v739 = vsub.s32 0, %v738
        %v740 = vrot.slane %v735, %v739
        %v746 = vunpack.c.l.b16 %v731
        %v747 = vunpack.c.l.b16 %v732
        %v748 = vunpack.c.l.b16 %v733
        %v749 = vunpack.c.l.b16 %v734
        %v750 = vpack.c.b16 %v747, %v746
        %v751 = vpack.c.b16 %v749, %v748
        %v755 = vsel %vm444, %v730, 0
        %757 = vmatprep.subr.bf16.mxu0 0
        %758 = vmatpush1.bf16.msra.mxu0 %v750
        %759 = vmatprep.subr.bf16.mxu0 0
        %760 = vmatpush1.bf16.msra.mxu0 %v751
        %761 = vmatprep.subr.bf16.mxu0 0
        %762 = vmatpush1.bf16.msra.mxu0 0
        %763 = vmatprep.subr.bf16.mxu0 0
        %764 = vmatpush1.bf16.msra.mxu0 0
        %765 = vmatprep.subr.bf16.mxu0 0
        %766 = vmatpush1.bf16.msra.mxu0 0
        %767 = vmatprep.subr.bf16.mxu0 0
        %768 = vmatpush1.bf16.msra.mxu0 0
        %769 = vmatprep.subr.bf16.mxu0 0
        %770 = vmatpush1.bf16.msra.mxu0 0
        %771 = vmatprep.subr.bf16.mxu0 0
        %772 = vmatpush1.bf16.msra.mxu0 0
        %773 = vmatprep.subr.bf16.mxu0 0
        %774 = vmatpush1.bf16.msra.mxu0 0
        %775 = vmatprep.subr.bf16.mxu0 0
        %776 = vmatpush1.bf16.msra.mxu0 0
        %777 = vmatprep.subr.bf16.mxu0 0
        %778 = vmatpush1.bf16.msra.mxu0 0
        %779 = vmatprep.subr.bf16.mxu0 0
        %780 = vmatpush1.bf16.msra.mxu0 0
        %781 = vmatprep.subr.bf16.mxu0 0
        %782 = vmatpush1.bf16.msra.mxu0 0
        %783 = vmatprep.subr.bf16.mxu0 0
        %784 = vmatpush1.bf16.msra.mxu0 0
        %785 = vmatprep.subr.bf16.mxu0 0
        %786 = vmatpush1.bf16.msra.mxu0 0
        %787 = vmatprep.subr.bf16.mxu0 0
        %788 = vmatpush1.bf16.msra.mxu0 0
        %789 = vmatprep.mubr.bf16.mxu0 0
        %790 = vmatmul.mubr.bf16.gmra.mrb[0].mxu0 %v755
        %v791 = vpop.f32.mrb[0].mxu0
        %v792 = vadd.f32 %v740, %v791
        %v793 = vpop.f32.mrb[0].mxu0
        %v794 = vpop.f32.mrb[0].mxu0
        %v795 = vadd.f32 %v740, %v794
        %v796 = vpop.f32.mrb[0].mxu0
        %797 = vdwg.mxu0
        %v798 = vmul.f32 %v792, 0.5
        %v799 = vmul.f32 %v795, 0.5
        %v800 = vmul.f32 %v792, 0.044715
        %v801 = vmul.f32 %v795, 0.044715
        %v802 = vmul.f32 %v800, %v792
        %v803 = vmul.f32 %v801, %v795
        %v804 = vmul.f32 %v802, %v792
        %v805 = vmul.f32 %v803, %v795
        %v806 = vadd.f32 %v792, %v804
        %v807 = vadd.f32 %v795, %v805
        %v808 = vmul.f32 %v806, 0.7978846
        %v809 = vmul.f32 %v807, 0.7978846
        %v810 = vtanh.pop %v808
        %v811 = vtanh.pop %v809
        %v812 = vadd.f32 %v810, 1.0
        %v813 = vadd.f32 %v811, 1.0
        %v814 = vmul.f32 %v798, %v812
        %v815 = vmul.f32 %v799, %v813
        %v816 = vpack.c.bf16 %v815, %v814
        %v817 = vld [vmem:[%s11] sm:$0xf]
        %v818 = vld [vmem:[%s11 + $0x4] sm:$0xf]
        %v819 = vld [vmem:[%s11 + $0x8] sm:$0xf]
        %v820 = vld [vmem:[%s11 + $0xc] sm:$0xf]
        %v821 = vld [vmem:[%s11 + $0x10] sm:$0xf]
        %v822 = vld [vmem:[%s11 + $0x14] sm:$0xf]
        %v823 = vld [vmem:[%s11 + $0x18] sm:$0xf]
        %v824 = vld [vmem:[%s11 + $0x1c] sm:$0xf]
        %v825 = vld [vmem:[%s12] sm:$0x1]
        %v827 = vlaneseq
        %v828 = vshrl.u32 %v827, 7
        %v829 = vsub.s32 0, %v828
        %v830 = vrot.slane %v825, %v829
        %v840 = vunpack.c.l.b16 %v817
        %v841 = vunpack.c.l.b16 %v818
        %v842 = vunpack.c.l.b16 %v819
        %v843 = vunpack.c.l.b16 %v820
        %v844 = vunpack.c.l.b16 %v821
        %v845 = vunpack.c.l.b16 %v822
        %v846 = vunpack.c.l.b16 %v823
        %v847 = vunpack.c.l.b16 %v824
        %v848 = vpack.c.b16 %v841, %v840
        %v849 = vpack.c.b16 %v843, %v842
        %v850 = vpack.c.b16 %v845, %v844
        %v851 = vpack.c.b16 %v847, %v846
        %vm856 = vcmask 523264
        %v858 = vsel %vm856, %v816, 0
        %860 = vmatprep.subr.bf16.mxu0 0
        %861 = vmatpush1.bf16.msra.mxu0 %v848
        %862 = vmatprep.subr.bf16.mxu0 0
        %863 = vmatpush1.bf16.msra.mxu0 %v849
        %864 = vmatprep.subr.bf16.mxu0 0
        %865 = vmatpush1.bf16.msra.mxu0 %v850
        %866 = vmatprep.subr.bf16.mxu0 0
        %867 = vmatpush1.bf16.msra.mxu0 %v851
        %868 = vmatprep.subr.bf16.mxu0 0
        %869 = vmatpush1.bf16.msra.mxu0 0
        %870 = vmatprep.subr.bf16.mxu0 0
        %871 = vmatpush1.bf16.msra.mxu0 0
        %872 = vmatprep.subr.bf16.mxu0 0
        %873 = vmatpush1.bf16.msra.mxu0 0
        %874 = vmatprep.subr.bf16.mxu0 0
        %875 = vmatpush1.bf16.msra.mxu0 0
        %876 = vmatprep.subr.bf16.mxu0 0
        %877 = vmatpush1.bf16.msra.mxu0 0
        %878 = vmatprep.subr.bf16.mxu0 0
        %879 = vmatpush1.bf16.msra.mxu0 0
        %880 = vmatprep.subr.bf16.mxu0 0
        %881 = vmatpush1.bf16.msra.mxu0 0
        %882 = vmatprep.subr.bf16.mxu0 0
        %883 = vmatpush1.bf16.msra.mxu0 0
        %884 = vmatprep.subr.bf16.mxu0 0
        %885 = vmatpush1.bf16.msra.mxu0 0
        %886 = vmatprep.subr.bf16.mxu0 0
        %887 = vmatpush1.bf16.msra.mxu0 0
        %888 = vmatprep.subr.bf16.mxu0 0
        %889 = vmatpush1.bf16.msra.mxu0 0
        %890 = vmatprep.subr.bf16.mxu0 0
        %891 = vmatpush1.bf16.msra.mxu0 0
        %892 = vmatprep.mubr.bf16.mxu0 0
        %893 = vmatmul.mubr.bf16.gmra.mrb[0].mxu0 %v858
        %v894 = vpop.f32.mrb[0].mxu0
        %v895 = vadd.f32 %v830, %v894
        %v896 = vpop.f32.mrb[0].mxu0
        %v897 = vpop.f32.mrb[0].mxu0
        %v898 = vadd.f32 %v830, %v897
        %v899 = vpop.f32.mrb[0].mxu0
        %900 = vdwg.mxu0
        %v901 = vadd.f32 %v684, %v895
        %v902 = vadd.f32 %v685, %v898
        %903 = vst.msk [vmem:[%s433] sm:$0xff] %vm444, %v901
        %904 = vst.msk [vmem:[%s433 + $0x8] sm:$0xff] %vm444, %v902
        %s905 = sand.u32 %s313, 1
        %s906 = scalar_lea.sflag [#allocation3], %s905
        %s907 = sand.u32 %s313, 1
        %s908 = smul.addr %s907, 16
        %s909 = scalar_lea.vmem [#allocation2], %s908
        // Predicated region
        $region73: #{mixer_block2.1} parent=71 // pred_check
          %p910 = pneg %p323
        $region74: #{mixer_block2.1} parent=71 // pred_check_branch
          %912 = sbr.rel (%p910) target = $region76
        $region75: #{mixer_block2.1} parent=71 // pred_region
          %s914 = ssub.s32 256, 256
          %915 = vsyncadd %s906, %s914
          %s916 = smul.addr %s27, 2
          %s917 = smul.addr %s916, 128
          %s918 = scalar_lea.hbm %s13, %s917
          %s919 = sshll.u32 %s909, 4
          %s920 = int_to_ptr.vmem [resolvable:$true] %s919
          %925 = dma.vmem_to_hbm [thread:$0]  %s920, 256, %s918, %s906, 128, 128, 8
        $region76: #{mixer_block2.1} parent=71 // pred_fallthru
          _
      $region72: #{mixer_block2.1} parent=5 // pred_fallthru
        _
      %p926 = scmp.le.s32.totalorder 2, %s22
      // Predicated region
      $region77: #{mixer_block2.1} parent=5 // pred_check
        %p927 = pneg %p926
      $region78: #{mixer_block2.1} parent=5 // pred_check_branch
        %929 = sbr.rel (%p927) target = $region80
      $region79: #{mixer_block2.1} parent=5 // pred_region
        %s930 = ssub.s32 %s22, 2
        // Predicated region
        $region81: #{mixer_block2.1} parent=79 // pred_check
          %p931 = pneg %p329
        $region82: #{mixer_block2.1} parent=79 // pred_check_branch
          %933 = sbr.rel (%p931) target = $region84
        $region83: #{mixer_block2.1} parent=79 // pred_region
          %s934 = sand.u32 %s314, 1
          %s935 = scalar_lea.sflag [#allocation3], %s934
          %s936 = sand.u32 %s314, 1
          %s937 = smul.addr %s936, 16
          %s938 = scalar_lea.vmem [#allocation2], %s937
          %939 = dma.done %s935, 256
        $region84: #{mixer_block2.1} parent=79 // pred_fallthru
          _
      $region80: #{mixer_block2.1} parent=5 // pred_fallthru
        _
    $region6: #{mixer_block2.1} parent=1 // loop_footer
      %s26 = sadd.s32 1, %s22
    $region7: #{mixer_block2.1} parent=1 // loop_footer_branch
      %21 = sbr.rel target = $region3
    $region8: #{mixer_block2.1} parent=1 // loop_exit
      _
    %940 = vsyncpa [#allocation3], 1
    %s941 = scalar_lea.sflag [#allocation3], 1
    %942 = vsyncpa %s941, 1

</llo_original>
